<compile_context>
chip_gen: v5e
topology: v5e:2x2
jax: 0.10.0
libtpu: 0.0.40
codegen_flags: <defaults>
</compile_context>

<pallas_src>
import functools

import jax
import jax.numpy as jnp
from jax.experimental import pallas as pl
from jax.experimental.pallas import tpu as pltpu


def _avgpool_kernel(x_ref, pool_ref, o_ref, *, split_f32_matmul):
    """x_ref: (R, L*2W); pool_ref: (K, L*Wh); o_ref: (R, L*Wh).

    If K == L*2W the block-diagonal pool matrix performs the row-pair sum, the
    column-pair sum and the *0.25 scaling in one MXU pass.  If K == W (L == 1, large W)
    the row-pair sum is done on the VPU first and the matmul only pools column pairs.
    """
    xin = x_ref[...]
    kdim = pool_ref.shape[0]
    if kdim == x_ref.shape[1]:
        rows = xin                                   # fully folded: matmul does everything
    else:
        w = kdim
        rows = xin[:, :w] + xin[:, w:]               # row-pair sum on the VPU (input dtype)

    pool = pool_ref[...]
    if split_f32_matmul:
        # f32 rows at large W: run the MXU at bf16 rate without giving up f32 accuracy.
        # Pool entries are 0.25 (exact in bf16); the hi/lo bf16 split keeps ~17 mantissa
        # bits of the row sums and accumulation stays in f32.
        rows = rows.astype(jnp.float32)
        hi = rows.astype(jnp.bfloat16)
        lo = (rows - hi.astype(jnp.float32)).astype(jnp.bfloat16)
        acc = jnp.dot(hi, pool, preferred_element_type=jnp.float32)
        acc = acc + jnp.dot(lo, pool, preferred_element_type=jnp.float32)
    else:
        acc = jnp.dot(rows, pool, preferred_element_type=jnp.float32)
    o_ref[...] = acc.astype(o_ref.dtype)


def _choose_fold(total_pairs, Wh):
    """Number of row-pairs folded per kernel row so the output last dim is lane-dense."""
    if Wh >= 128:
        return 1
    target = min(-(-128 // Wh), total_pairs)         # ceil(128 / Wh)
    for l in range(target, 0, -1):
        if total_pairs % l == 0:
            return l
    return 1


def _choose_row_block(rows_total, row_bytes, sublane, budget_bytes=2 << 20):
    """Row-block size: divides rows_total, sublane aligned (or full extent), <= budget,
    preferring >= 8 grid steps (pipeline ramp + >= 2 steps per v7x TensorCore)."""
    max_rows = max(1, min(rows_total, budget_bytes // max(row_bytes, 1)))
    cands = []
    if rows_total <= max_rows:
        cands.append(rows_total)                     # full extent is always layout-legal
    r = (max_rows // sublane) * sublane
    while r >= sublane:
        if rows_total % r == 0:
            cands.append(r)
        r -= sublane
    if not cands:
        # Nothing aligned fits/divides (tiny or pathological shapes): single block.
        return rows_total
    for min_steps in (8, 4, 2, 1):
        best = max((c for c in cands if rows_total // c >= min_steps), default=None)
        if best is not None:
            return best
    return max(cands)


def _pool_matrix(W, Wh, L, folded, dtype):
    """Constant pooling matrix: pool[k, j] = 0.25 iff source column k feeds output j."""
    if folded:
        k = jnp.arange(L * 2 * W)
        out_col = (k // (2 * W)) * Wh + (k % W) // 2
        m = L * Wh
    else:
        k = jnp.arange(W)
        out_col = k // 2
        m = Wh
    j = jnp.arange(m)
    return jnp.where(out_col[:, None] == j[None, :], 0.25, 0.0).astype(dtype)


def avg_pool2d_2x2(x):
    """Equivalent of torch.nn.AvgPool2d(kernel_size=2) on an NCHW tensor."""
    N, C, H, W = x.shape
    Hh, Wh = H // 2, W // 2
    if (H % 2) or (W % 2):
        # PyTorch AvgPool2d(kernel_size=2) floors: drop the last row / column.
        # TODO(synk): this crop breaks contiguity and XLA materializes a cropped copy
        # (one extra HBM pass) before the kernel; handling the floor in-kernel (masked
        # tail in the pool matrix + ragged last row block) would avoid it.
        x = x[:, :, : 2 * Hh, : 2 * Wh]
        H, W = 2 * Hh, 2 * Wh
    P = N * C
    total_pairs = P * Hh

    itemsize = jnp.dtype(x.dtype).itemsize
    sublane = max(8, 32 // itemsize)                 # 8 for f32, 16 for bf16, 32 for int8

    folded = Wh < 128
    L = _choose_fold(total_pairs, Wh) if folded else 1
    rows_total = total_pairs // L
    in_cols = L * 2 * W
    out_cols = L * Wh

    is_bf16 = x.dtype == jnp.bfloat16
    split_f32 = (x.dtype == jnp.float32) and (not folded) and (W >= 512)
    pool_dtype = jnp.bfloat16 if (is_bf16 or split_f32) else jnp.float32
    pool = _pool_matrix(W, Wh, L, folded, pool_dtype)
    K, M = pool.shape

    row_bytes = (in_cols + out_cols) * itemsize
    Rb = _choose_row_block(rows_total, row_bytes, sublane)
    grid = (rows_total // Rb,)

    # FREE reshape (x is contiguous): NCHW -> (rows_total, L*2W).
    xr = x.reshape(rows_total, in_cols)

    matmul_flops = 2 * rows_total * K * M * (2 if split_f32 else 1)
    add_flops = 0 if folded else rows_total * W
    bytes_accessed = rows_total * (in_cols + out_cols) * itemsize + K * M * jnp.dtype(pool_dtype).itemsize

    kernel = functools.partial(_avgpool_kernel, split_f32_matmul=split_f32)

    out2d = pl.pallas_call(
        kernel,
        out_shape=jax.ShapeDtypeStruct((rows_total, out_cols), x.dtype),
        grid_spec=pltpu.PrefetchScalarGridSpec(
            num_scalar_prefetch=0,
            grid=grid,
            in_specs=[
                pl.BlockSpec((Rb, in_cols), lambda i: (i, 0)),
                pl.BlockSpec((K, M), lambda i: (0, 0)),
            ],
            out_specs=pl.BlockSpec((Rb, out_cols), lambda i: (i, 0)),
        ),
        compiler_params=pltpu.CompilerParams(
            dimension_semantics=("parallel",),
            vmem_limit_bytes=32 * 1024 * 1024,
        ),
        cost_estimate=pl.CostEstimate(
            flops=int(matmul_flops + add_flops),
            transcendentals=0,
            bytes_accessed=int(bytes_accessed),
        ),
    )(xr, pool)

    # FREE reshape back to NCHW output.
    return out2d.reshape(N, C, Hh, Wh)


if __name__ == "__main__":
    key = jax.random.PRNGKey(0)
    # Small NCHW input consistent with the module's forward.
    x = jax.random.normal(key, (2, 4, 16, 16), dtype=jnp.float32)

    y = avg_pool2d_2x2(x)
    y = jax.block_until_ready(y)

    # Reference check (plain JAX) for AvgPool2d(kernel_size=2) semantics.
    ref = x.reshape(2, 4, 8, 2, 8, 2).mean(axis=(3, 5))
    assert y.shape == (2, 4, 8, 8)
    assert jnp.allclose(y, ref, atol=1e-5, rtol=1e-5)

    print("KERNEL_OK")
</pallas_src>

<mosaic_0001>
module attributes {stable_mosaic.version = 11 : i64} {
  func.func @_avgpool_kernel(%arg0: i32, %arg1: memref<4x512xf32, #tpu.memory_space<vmem>>, %arg2: memref<512x128xf32, #tpu.memory_space<vmem>>, %arg3: memref<4x128xf32, #tpu.memory_space<vmem>>) attributes {dimension_semantics = [#tpu.dimension_semantics<parallel>], iteration_bounds = array<i64: 1>, scalar_prefetch = 0 : i64, scratch_operands = 0 : i64, tpu.core_type = #tpu.core_type<tc>, window_params = [{transform_indices = @transform_0, window_bounds = array<i64: 4, 512>}, {pipeline_mode = #tpu.pipeline_mode<synchronous>, transform_indices = @transform_1, window_bounds = array<i64: 512, 128>}, {transform_indices = @transform_2, window_bounds = array<i64: 4, 128>}]} {
    %c0 = arith.constant 0 : index
    %c0_0 = arith.constant 0 : index
    %0 = vector.load %arg1[%c0, %c0_0] : memref<4x512xf32, #tpu.memory_space<vmem>>, vector<4x512xf32>
    %c0_1 = arith.constant 0 : index
    %c0_2 = arith.constant 0 : index
    %1 = vector.load %arg2[%c0_1, %c0_2] : memref<512x128xf32, #tpu.memory_space<vmem>>, vector<512x128xf32>
    %cst = arith.constant dense<0.000000e+00> : vector<4x128xf32>
    %2 = tpu.matmul %0, %1, %cst {dimension_numbers = #tpu.dot_dimension_numbers<[1], [0], [0], [1], [0, 0, 1, 1], [], []>} : vector<4x512xf32>, vector<512x128xf32>, vector<4x128xf32> -> vector<4x128xf32>
    %c0_3 = arith.constant 0 : index
    %c0_4 = arith.constant 0 : index
    %3 = vector.load %arg3[%c0_3, %c0_4] : memref<4x128xf32, #tpu.memory_space<vmem>>, vector<4x128xf32>
    tpu.vector_store %arg3[%c0_3, %c0_4], %2 {strides = array<i32>} : memref<4x128xf32, #tpu.memory_space<vmem>>, vector<4x128xf32>,
    return
  }
  func.func @transform_0(%arg0: i32) -> (i32, i32) {
    %c0_i32 = arith.constant 0 : i32
    %c0_i32_0 = arith.constant 0 : i32
    return %arg0, %c0_i32 : i32, i32
  }
  func.func @transform_1(%arg0: i32) -> (i32, i32) {
    %c0_i32 = arith.constant 0 : i32
    %c0_i32_0 = arith.constant 0 : i32
    %c0_i32_1 = arith.constant 0 : i32
    return %c0_i32, %c0_i32_0 : i32, i32
  }
  func.func @transform_2(%arg0: i32) -> (i32, i32) {
    %c0_i32 = arith.constant 0 : i32
    %c0_i32_0 = arith.constant 0 : i32
    return %arg0, %c0_i32 : i32, i32
  }
}

</mosaic_0001>

<llo_original>
// kernel: tpu_custom_call.1
$region0: #{tpu_custom_call.1}
  #allocation0 [shape = 'u32[]', space=smem, size = 0x4, offset = 0x4, fixed_abs, tag = 'smem constant byte address 0x4 - core index']
  #allocation1 [shape = 'u32[72,128]{1,0:T(1,128)}', space=vmem, size = 0x9000, scoped, tag = 'internal scratch']
  %s0 = inlined_call_operand.hbm [shape: f32[4,512], index: 0, kind: input, shape index: {}]
  %s1 = inlined_call_operand.hbm [shape: f32[512,128], index: 1, kind: input, shape index: {}]
  %s2 = inlined_call_operand.hbm [shape: f32[4,128], index: 2, kind: output, shape index: {}]
  %s3 = sld [smem:[#allocation0]]
  $region26: #{tpu_custom_call.1} parent=0
    _
  %s5 = ssub.s32 1, %s3
  %s6 = scalar_select 0, %s5, %s3
  $region1: #{tpu_custom_call.1} parent=0
    #allocation2 [shape = 'u8[8192]{0}', space=vmem, size = 0x2000, scoped, tag = 'input window, operand 0, single buffered']
    #allocation3 [shape = 's32[1]{0}', space=sflag, size = 0x4, scoped, tag = 'scoped memory for tpu_custom_call.1']
    #allocation4 [shape = 's32[1]{0}', space=sflag, size = 0x4, scoped, tag = 'scoped memory for tpu_custom_call.1']
    #allocation5 [shape = 'u8[262144]{0}', space=vmem, size = 0x40000, scoped, tag = 'input window, operand 1, single buffered']
    #allocation6 [shape = 's32[1]{0}', space=sflag, size = 0x4, scoped, tag = 'scoped memory for tpu_custom_call.1']
    #allocation7 [shape = 'u8[2048]{0}', space=vmem, size = 0x800, scoped, tag = 'output window, operand 0, single buffered']
    %7 = vsyncpa [#allocation3], 0
    %8 = vsyncpa [#allocation6], 0
    %9 = vsyncpa [#allocation4], 0
    // Predicated region
    $region2: #{tpu_custom_call.1} parent=1 // pred_check
      _
    $region3: #{tpu_custom_call.1} parent=1 // pred_check_branch
      %11 = sbr.rel (0) target = $region5
    $region4: #{tpu_custom_call.1} parent=1 // pred_region
      %13 = vsyncadd [#allocation3], 0
      %s15 = sshll.u32 %s0, 4
      %s16 = int_to_ptr.hbm [resolvable:$true] %s15
      %s17 = sshll.u32 [#allocation2], 4
      %s18 = int_to_ptr.vmem [resolvable:$true] %s17
      %20 = dma.hbm_to_vmem [thread:$0]  %s16, 256, %s18, [#allocation3]
    $region5: #{tpu_custom_call.1} parent=1 // pred_fallthru
      _
    // Predicated region
    $region6: #{tpu_custom_call.1} parent=1 // pred_check
      _
    $region7: #{tpu_custom_call.1} parent=1 // pred_check_branch
      %22 = sbr.rel (0) target = $region9
    $region8: #{tpu_custom_call.1} parent=1 // pred_region
      %24 = vsyncadd [#allocation6], 0
      %s25 = sshll.u32 %s1, 4
      %s26 = int_to_ptr.hbm [resolvable:$true] %s25
      %s27 = sshll.u32 [#allocation5], 4
      %s28 = int_to_ptr.vmem [resolvable:$true] %s27
      %33 = dma.hbm_to_vmem [thread:$0]  %s26, 8192, %s28, [#allocation6], 128, 128, 8
    $region9: #{tpu_custom_call.1} parent=1 // pred_fallthru
      _
    // Predicated region
    $region10: #{tpu_custom_call.1} parent=1 // pred_check
      _
    $region11: #{tpu_custom_call.1} parent=1 // pred_check_branch
      %35 = sbr.rel (0) target = $region13
    $region12: #{tpu_custom_call.1} parent=1 // pred_region
      %37 = dma.done [#allocation3], 256
    $region13: #{tpu_custom_call.1} parent=1 // pred_fallthru
      _
    // Predicated region
    $region14: #{tpu_custom_call.1} parent=1 // pred_check
      _
    $region15: #{tpu_custom_call.1} parent=1 // pred_check_branch
      %39 = sbr.rel (0) target = $region17
    $region16: #{tpu_custom_call.1} parent=1 // pred_region
      %41 = dma.done [#allocation6], 8192
    $region17: #{tpu_custom_call.1} parent=1 // pred_fallthru
      _
    %v42 = vld [vmem:[#allocation2] sm:$0xff]
    %v43 = vld [vmem:[#allocation2 + $0x8] sm:$0xff]
    %v44 = vld [vmem:[#allocation5] sm:$0xff]
    %v45 = vld [vmem:[#allocation5 + $0x8] sm:$0xff]
    %v46 = vld [vmem:[#allocation5 + $0x10] sm:$0xff]
    %v47 = vld [vmem:[#allocation5 + $0x18] sm:$0xff]
    %v48 = vld [vmem:[#allocation5 + $0x20] sm:$0xff]
    %v49 = vld [vmem:[#allocation5 + $0x28] sm:$0xff]
    %v50 = vld [vmem:[#allocation5 + $0x30] sm:$0xff]
    %v51 = vld [vmem:[#allocation5 + $0x38] sm:$0xff]
    %v52 = vld [vmem:[#allocation5 + $0x40] sm:$0xff]
    %v53 = vld [vmem:[#allocation5 + $0x48] sm:$0xff]
    %v54 = vld [vmem:[#allocation5 + $0x50] sm:$0xff]
    %v55 = vld [vmem:[#allocation5 + $0x58] sm:$0xff]
    %v56 = vld [vmem:[#allocation5 + $0x60] sm:$0xff]
    %v57 = vld [vmem:[#allocation5 + $0x68] sm:$0xff]
    %v58 = vld [vmem:[#allocation5 + $0x70] sm:$0xff]
    %v59 = vld [vmem:[#allocation5 + $0x78] sm:$0xff]
    %v60 = vld [vmem:[#allocation5 + $0x80] sm:$0xff]
    %v61 = vld [vmem:[#allocation5 + $0x88] sm:$0xff]
    %v62 = vld [vmem:[#allocation5 + $0x90] sm:$0xff]
    %v63 = vld [vmem:[#allocation5 + $0x98] sm:$0xff]
    %v64 = vld [vmem:[#allocation5 + $0xa0] sm:$0xff]
    %v65 = vld [vmem:[#allocation5 + $0xa8] sm:$0xff]
    %v66 = vld [vmem:[#allocation5 + $0xb0] sm:$0xff]
    %v67 = vld [vmem:[#allocation5 + $0xb8] sm:$0xff]
    %v68 = vld [vmem:[#allocation5 + $0xc0] sm:$0xff]
    %v69 = vld [vmem:[#allocation5 + $0xc8] sm:$0xff]
    %v70 = vld [vmem:[#allocation5 + $0xd0] sm:$0xff]
    %v71 = vld [vmem:[#allocation5 + $0xd8] sm:$0xff]
    %v72 = vld [vmem:[#allocation5 + $0xe0] sm:$0xff]
    %v73 = vld [vmem:[#allocation5 + $0xe8] sm:$0xff]
    %v74 = vld [vmem:[#allocation5 + $0xf0] sm:$0xff]
    %v75 = vld [vmem:[#allocation5 + $0xf8] sm:$0xff]
    %v76 = vld [vmem:[#allocation5 + $0x100] sm:$0xff]
    %v77 = vld [vmem:[#allocation5 + $0x108] sm:$0xff]
    %v78 = vld [vmem:[#allocation5 + $0x110] sm:$0xff]
    %v79 = vld [vmem:[#allocation5 + $0x118] sm:$0xff]
    %v80 = vld [vmem:[#allocation5 + $0x120] sm:$0xff]
    %v81 = vld [vmem:[#allocation5 + $0x128] sm:$0xff]
    %v82 = vld [vmem:[#allocation5 + $0x130] sm:$0xff]
    %v83 = vld [vmem:[#allocation5 + $0x138] sm:$0xff]
    %v84 = vld [vmem:[#allocation5 + $0x140] sm:$0xff]
    %v85 = vld [vmem:[#allocation5 + $0x148] sm:$0xff]
    %v86 = vld [vmem:[#allocation5 + $0x150] sm:$0xff]
    %v87 = vld [vmem:[#allocation5 + $0x158] sm:$0xff]
    %v88 = vld [vmem:[#allocation5 + $0x160] sm:$0xff]
    %v89 = vld [vmem:[#allocation5 + $0x168] sm:$0xff]
    %v90 = vld [vmem:[#allocation5 + $0x170] sm:$0xff]
    %v91 = vld [vmem:[#allocation5 + $0x178] sm:$0xff]
    %v92 = vld [vmem:[#allocation5 + $0x180] sm:$0xff]
    %v93 = vld [vmem:[#allocation5 + $0x188] sm:$0xff]
    %v94 = vld [vmem:[#allocation5 + $0x190] sm:$0xff]
    %v95 = vld [vmem:[#allocation5 + $0x198] sm:$0xff]
    %v96 = vld [vmem:[#allocation5 + $0x1a0] sm:$0xff]
    %v97 = vld [vmem:[#allocation5 + $0x1a8] sm:$0xff]
    %v98 = vld [vmem:[#allocation5 + $0x1b0] sm:$0xff]
    %v99 = vld [vmem:[#allocation5 + $0x1b8] sm:$0xff]
    %v100 = vld [vmem:[#allocation5 + $0x1c0] sm:$0xff]
    %v101 = vld [vmem:[#allocation5 + $0x1c8] sm:$0xff]
    %v102 = vld [vmem:[#allocation5 + $0x1d0] sm:$0xff]
    %v103 = vld [vmem:[#allocation5 + $0x1d8] sm:$0xff]
    %v104 = vld [vmem:[#allocation5 + $0x1e0] sm:$0xff]
    %v105 = vld [vmem:[#allocation5 + $0x1e8] sm:$0xff]
    %v106 = vld [vmem:[#allocation5 + $0x1f0] sm:$0xff]
    %v107 = vld [vmem:[#allocation5 + $0x1f8] sm:$0xff]
    %110 = vst [vmem:[#allocation1] ss:$2 sm:$0xff] %v42
    %s111 = scalar_lea.vmem [#allocation1], 16
    %112 = vst [vmem:[%s111] ss:$2 sm:$0xff] %v43
    %v113 = vld.sshfl [vmem:[#allocation1] sm:$0xff pattern:$0x75316420]
    %v114 = vld.sshfl [vmem:[#allocation1 + $0x8] sm:$0xff pattern:$0x75316420]
    %v115 = vld.sshfl [vmem:[#allocation1 + $0x10] sm:$0xff pattern:$0x75316420]
    %v116 = vld.sshfl [vmem:[#allocation1 + $0x18] sm:$0xff pattern:$0x75316420]
    %121 = vmatpush.msra.mxu0 %v59
    %122 = vmatpush.msra.mxu0 %v58
    %123 = vmatpush.msra.mxu0 %v57
    %124 = vmatpush.msra.mxu0 %v56
    %125 = vmatpush.msra.mxu0 %v55
    %126 = vmatpush.msra.mxu0 %v54
    %127 = vmatpush.msra.mxu0 %v53
    %128 = vmatpush.msra.mxu0 %v52
    %129 = vmatpush.msra.mxu0 %v51
    %130 = vmatpush.msra.mxu0 %v50
    %131 = vmatpush.msra.mxu0 %v49
    %132 = vmatpush.msra.mxu0 %v48
    %133 = vmatpush.msra.mxu0 %v47
    %134 = vmatpush.msra.mxu0 %v46
    %135 = vmatpush.msra.mxu0 %v45
    %136 = vmatpush.msra.mxu0 %v44
    %137 = vmatmul.f32.gmra.mxu0 %v113
    %v138 = vpop.f32.mrf.mxu0
    %v139 = vadd.f32 0.0, %v138
    %140 = vdwg.mxu0
    %141 = vmatpush.msra.mxu0 %v75
    %142 = vmatpush.msra.mxu0 %v74
    %143 = vmatpush.msra.mxu0 %v73
    %144 = vmatpush.msra.mxu0 %v72
    %145 = vmatpush.msra.mxu0 %v71
    %146 = vmatpush.msra.mxu0 %v70
    %147 = vmatpush.msra.mxu0 %v69
    %148 = vmatpush.msra.mxu0 %v68
    %149 = vmatpush.msra.mxu0 %v67
    %150 = vmatpush.msra.mxu0 %v66
    %151 = vmatpush.msra.mxu0 %v65
    %152 = vmatpush.msra.mxu0 %v64
    %153 = vmatpush.msra.mxu0 %v63
    %154 = vmatpush.msra.mxu0 %v62
    %155 = vmatpush.msra.mxu0 %v61
    %156 = vmatpush.msra.mxu0 %v60
    %157 = vmatmul.f32.gmra.mxu0 %v114
    %v158 = vpop.f32.mrf.mxu0
    %v159 = vadd.f32 %v139, %v158
    %160 = vdwg.mxu0
    %161 = vmatpush.msra.mxu0 %v91
    %162 = vmatpush.msra.mxu0 %v90
    %163 = vmatpush.msra.mxu0 %v89
    %164 = vmatpush.msra.mxu0 %v88
    %165 = vmatpush.msra.mxu0 %v87
    %166 = vmatpush.msra.mxu0 %v86
    %167 = vmatpush.msra.mxu0 %v85
    %168 = vmatpush.msra.mxu0 %v84
    %169 = vmatpush.msra.mxu0 %v83
    %170 = vmatpush.msra.mxu0 %v82
    %171 = vmatpush.msra.mxu0 %v81
    %172 = vmatpush.msra.mxu0 %v80
    %173 = vmatpush.msra.mxu0 %v79
    %174 = vmatpush.msra.mxu0 %v78
    %175 = vmatpush.msra.mxu0 %v77
    %176 = vmatpush.msra.mxu0 %v76
    %177 = vmatmul.f32.gmra.mxu0 %v115
    %v178 = vpop.f32.mrf.mxu0
    %v179 = vadd.f32 %v159, %v178
    %180 = vdwg.mxu0
    %181 = vmatpush.msra.mxu0 %v107
    %182 = vmatpush.msra.mxu0 %v106
    %183 = vmatpush.msra.mxu0 %v105
    %184 = vmatpush.msra.mxu0 %v104
    %185 = vmatpush.msra.mxu0 %v103
    %186 = vmatpush.msra.mxu0 %v102
    %187 = vmatpush.msra.mxu0 %v101
    %188 = vmatpush.msra.mxu0 %v100
    %189 = vmatpush.msra.mxu0 %v99
    %190 = vmatpush.msra.mxu0 %v98
    %191 = vmatpush.msra.mxu0 %v97
    %192 = vmatpush.msra.mxu0 %v96
    %193 = vmatpush.msra.mxu0 %v95
    %194 = vmatpush.msra.mxu0 %v94
    %195 = vmatpush.msra.mxu0 %v93
    %196 = vmatpush.msra.mxu0 %v92
    %197 = vmatmul.f32.gmra.mxu0 %v116
    %v198 = vpop.f32.mrf.mxu0
    %v199 = vadd.f32 %v179, %v198
    %200 = vdwg.mxu0
    %201 = vst [vmem:[#allocation7] sm:$0xf] %v199
    // Predicated region
    $region18: #{tpu_custom_call.1} parent=1 // pred_check
      _
    $region19: #{tpu_custom_call.1} parent=1 // pred_check_branch
      %203 = sbr.rel (0) target = $region21
    $region20: #{tpu_custom_call.1} parent=1 // pred_region
      %205 = vsyncadd [#allocation4], 0
      %s207 = sshll.u32 [#allocation7], 4
      %s208 = int_to_ptr.vmem [resolvable:$true] %s207
      %s209 = sshll.u32 %s2, 4
      %s210 = int_to_ptr.hbm [resolvable:$true] %s209
      %212 = dma.vmem_to_hbm [thread:$0]  %s208, 64, %s210, [#allocation4]
    $region21: #{tpu_custom_call.1} parent=1 // pred_fallthru
      _
    // Predicated region
    $region22: #{tpu_custom_call.1} parent=1 // pred_check
      _
    $region23: #{tpu_custom_call.1} parent=1 // pred_check_branch
      %214 = sbr.rel (0) target = $region25
    $region24: #{tpu_custom_call.1} parent=1 // pred_region
      %216 = dma.done [#allocation4], 64
    $region25: #{tpu_custom_call.1} parent=1 // pred_fallthru
      _
    %217 = vsyncpa [#allocation3], 1
    %218 = vsyncpa [#allocation6], 1
    %219 = vsyncpa [#allocation4], 1

</llo_original>
